<compile_context>
chip_gen: v7x
topology: tpu7x:2x2x1
jax: 0.10.0
libtpu: 0.0.40
codegen_flags: <defaults>
</compile_context>

<pallas_src>
import math

import jax
import jax.numpy as jnp
from jax.experimental import pallas as pl
from jax.experimental.pallas import tpu as pltpu

EPS = 1e-5
F_IN = 20
F_HID = 10
F_OUT = 10

# Row indices of the packed (9, F_IN) vector slab.
_V_G0, _V_BE0, _V_B1, _V_G1, _V_BE1, _V_B2, _V_G2, _V_BE2, _V_B3 = range(9)


def top_model_kernel(x_ref, w_ref, v_ref, out_ref):
    """Whole forward pass on one VMEM-resident block (everything is tiny)."""
    batch = x_ref.shape[0]
    inv_b = 1.0 / float(batch)

    vecs = v_ref[...]        # (9, 20)  -> static row/col slices below
    w = w_ref[...]           # (3, 20, 10), zero-padded rows for layers 2/3
    w1 = w[0]                # (20, 10)
    w2 = w[1, :F_HID, :]     # (10, 10)
    w3 = w[2, :F_HID, :]     # (10, 10)

    # Single (1, B) ones row: BN sums run on the (otherwise idle) MXU.
    ones_row = jnp.ones((1, batch), jnp.float32)

    def bn_relu(h, gamma, beta):
        # BatchNorm1d (training): single-pass batch mean / biased variance.
        mu = jnp.dot(ones_row, h, preferred_element_type=jnp.float32) * inv_b
        msq = jnp.dot(ones_row, h * h, preferred_element_type=jnp.float32) * inv_b
        var = jnp.maximum(msq - mu * mu, 0.0)
        hn = (h - mu) * jax.lax.rsqrt(var + EPS)
        return jnp.maximum(hn * gamma + beta, 0.0)

    x = x_ref[...]           # (B, 20)

    h = bn_relu(x, vecs[_V_G0:_V_G0 + 1, :], vecs[_V_BE0:_V_BE0 + 1, :])
    h = (jnp.dot(h, w1, preferred_element_type=jnp.float32)
         + vecs[_V_B1:_V_B1 + 1, :F_HID])

    h = bn_relu(h, vecs[_V_G1:_V_G1 + 1, :F_HID], vecs[_V_BE1:_V_BE1 + 1, :F_HID])
    h = (jnp.dot(h, w2, preferred_element_type=jnp.float32)
         + vecs[_V_B2:_V_B2 + 1, :F_HID])

    h = bn_relu(h, vecs[_V_G2:_V_G2 + 1, :F_HID], vecs[_V_BE2:_V_BE2 + 1, :F_HID])
    h = (jnp.dot(h, w3, preferred_element_type=jnp.float32)
         + vecs[_V_B3:_V_B3 + 1, :F_OUT])

    # log_softmax over the native (unpadded) 10 logit lanes.
    m = jnp.max(h, axis=1, keepdims=True)
    s = h - m
    lse = jnp.log(jnp.sum(jnp.exp(s), axis=1, keepdims=True))
    out_ref[...] = s - lse


def pack_params(params):
    """Pack the 12 parameter arrays into 2 tiny slabs (done once, reused)."""
    w_pack = jnp.zeros((3, F_IN, F_HID), jnp.float32)
    w_pack = w_pack.at[0, :, :].set(params["w1"])
    w_pack = w_pack.at[1, :F_HID, :].set(params["w2"])
    w_pack = w_pack.at[2, :F_HID, :].set(params["w3"])

    def pad_row(v):
        v = v.reshape(-1)
        return jnp.zeros((F_IN,), jnp.float32).at[: v.shape[0]].set(v)

    rows = [params[k] for k in
            ("g0", "be0", "b1", "g1", "be1", "b2", "g2", "be2", "b3")]
    v_pack = jnp.stack([pad_row(r) for r in rows])   # (9, 20)
    return {"w_pack": w_pack, "v_pack": v_pack}


def vanilla_top_model_forward(x, packed):
    B = x.shape[0]

    # Advisory cost: 3 linears + 2 MXU BN-sum passes per BN layer + exp/log.
    mm_flops = 2 * B * (F_IN * F_HID + F_HID * F_HID + F_HID * F_OUT)
    bn_flops = 2 * 2 * B * (F_IN + F_HID + F_HID)
    cost = pl.CostEstimate(
        flops=int(mm_flops + bn_flops),
        transcendentals=int(B * (F_OUT + 1) + 3 * B),
        bytes_accessed=int(4 * (x.size + packed["w_pack"].size
                                + packed["v_pack"].size + B * F_OUT)),
    )

    # Explicit scoped-VMEM limit: ~8 lane-padded (B,128) f32 live intermediates
    # + double-buffered I/O slabs + headroom; capped at v7x's 64 MiB physical.
    live = 8 * B * 128 * 4
    io = 2 * 4 * (B * F_IN + B * F_OUT
                  + int(packed["w_pack"].size) + int(packed["v_pack"].size))
    vmem_limit = min(64 << 20, max(2 << 20, int(live + io + (1 << 20))))

    return pl.pallas_call(
        top_model_kernel,
        out_shape=jax.ShapeDtypeStruct((B, F_OUT), jnp.float32),
        in_specs=[pl.BlockSpec(memory_space=pltpu.MemorySpace.VMEM)] * 3,
        out_specs=pl.BlockSpec(memory_space=pltpu.MemorySpace.VMEM),
        compiler_params=pltpu.CompilerParams(vmem_limit_bytes=vmem_limit),
        cost_estimate=cost,
    )(x, packed["w_pack"], packed["v_pack"])


def init_params(key):
    """Deterministic init matching the PyTorch module's __init__ semantics.

    Linear weights: kaiming_normal_ (std = sqrt(2 / fan_in)), stored transposed
    as (in, out).  Linear biases: PyTorch default U(-1/sqrt(fan_in), 1/sqrt(fan_in)).
    BatchNorm gamma=1, beta=0.
    """
    ks = jax.random.split(key, 6)

    def linear(kw, kb, fan_in, fan_out):
        std = math.sqrt(2.0 / fan_in)
        w = jax.random.normal(kw, (fan_in, fan_out), jnp.float32) * std
        bound = 1.0 / math.sqrt(fan_in)
        b = jax.random.uniform(kb, (1, fan_out), jnp.float32, -bound, bound)
        return w, b

    w1, b1 = linear(ks[0], ks[1], F_IN, F_HID)
    w2, b2 = linear(ks[2], ks[3], F_HID, F_HID)
    w3, b3 = linear(ks[4], ks[5], F_HID, F_OUT)

    return {
        "w1": w1, "b1": b1,
        "w2": w2, "b2": b2,
        "w3": w3, "b3": b3,
        "g0": jnp.ones((1, F_IN), jnp.float32), "be0": jnp.zeros((1, F_IN), jnp.float32),
        "g1": jnp.ones((1, F_HID), jnp.float32), "be1": jnp.zeros((1, F_HID), jnp.float32),
        "g2": jnp.ones((1, F_HID), jnp.float32), "be2": jnp.zeros((1, F_HID), jnp.float32),
    }


def reference_forward(x, p):
    def bn_relu(h, g, b):
        mu = jnp.mean(h, axis=0, keepdims=True)
        var = jnp.mean((h - mu) ** 2, axis=0, keepdims=True)
        return jnp.maximum((h - mu) / jnp.sqrt(var + EPS) * g + b, 0.0)

    h = bn_relu(x, p["g0"], p["be0"]) @ p["w1"] + p["b1"]
    h = bn_relu(h, p["g1"], p["be1"]) @ p["w2"] + p["b2"]
    h = bn_relu(h, p["g2"], p["be2"]) @ p["w3"] + p["b3"]
    return jax.nn.log_softmax(h, axis=1)


if __name__ == "__main__":
    key = jax.random.PRNGKey(0)
    k_x, k_p = jax.random.split(key)

    B = 8
    x = jax.random.normal(k_x, (B, F_IN), jnp.float32)
    params = init_params(k_p)
    packed = pack_params(params)  # one-time packing; reused across calls

    out = vanilla_top_model_forward(x, packed)
    out = jax.block_until_ready(out)

    ref = reference_forward(x, params)
    assert out.shape == (B, F_OUT)
    assert jnp.allclose(out, ref, atol=1e-4, rtol=1e-4), "mismatch vs JAX reference"

    print("KERNEL_OK")
</pallas_src>

<mosaic_0001>
module attributes {stable_mosaic.version = 11 : i64} {
  func.func @top_model_kernel(%arg0: memref<8x20xf32, #tpu.memory_space<vmem>>, %arg1: memref<3x20x10xf32, #tpu.memory_space<vmem>>, %arg2: memref<9x20xf32, #tpu.memory_space<vmem>>, %arg3: memref<8x10xf32, #tpu.memory_space<vmem>>) attributes {dimension_semantics = [], scalar_prefetch = 0 : i64, scratch_operands = 0 : i64, tpu.core_type = #tpu.core_type<tc>} {
    %c0 = arith.constant 0 : index
    %c0_0 = arith.constant 0 : index
    %0 = vector.load %arg2[%c0, %c0_0] : memref<9x20xf32, #tpu.memory_space<vmem>>, vector<9x20xf32>
    %c0_1 = arith.constant 0 : index
    %c0_2 = arith.constant 0 : index
    %c0_3 = arith.constant 0 : index
    %1 = vector.load %arg1[%c0_1, %c0_2, %c0_3] : memref<3x20x10xf32, #tpu.memory_space<vmem>>, vector<3x20x10xf32>
    %2 = vector.extract_strided_slice %1 {offsets = [0, 0, 0], sizes = [1, 20, 10], strides = [1, 1, 1]} : vector<3x20x10xf32> to vector<1x20x10xf32>
    %3 = vector.shape_cast %2 : vector<1x20x10xf32> to vector<20x10xf32>
    %4 = vector.extract_strided_slice %1 {offsets = [1, 0, 0], sizes = [1, 10, 10], strides = [1, 1, 1]} : vector<3x20x10xf32> to vector<1x10x10xf32>
    %5 = vector.shape_cast %4 : vector<1x10x10xf32> to vector<10x10xf32>
    %6 = vector.extract_strided_slice %1 {offsets = [2, 0, 0], sizes = [1, 10, 10], strides = [1, 1, 1]} : vector<3x20x10xf32> to vector<1x10x10xf32>
    %7 = vector.shape_cast %6 : vector<1x10x10xf32> to vector<10x10xf32>
    %cst = arith.constant 1.000000e+00 : f32
    %8 = vector.broadcast %cst : f32 to vector<1x8xf32>
    %c0_4 = arith.constant 0 : index
    %c0_5 = arith.constant 0 : index
    %9 = vector.load %arg0[%c0_4, %c0_5] : memref<8x20xf32, #tpu.memory_space<vmem>>, vector<8x20xf32>
    %10 = vector.extract_strided_slice %0 {offsets = [0, 0], sizes = [1, 20], strides = [1, 1]} : vector<9x20xf32> to vector<1x20xf32>
    %11 = vector.extract_strided_slice %0 {offsets = [1, 0], sizes = [1, 20], strides = [1, 1]} : vector<9x20xf32> to vector<1x20xf32>
    %cst_6 = arith.constant dense<0.000000e+00> : vector<1x20xf32>
    %12 = tpu.matmul %8, %9, %cst_6 {dimension_numbers = #tpu.dot_dimension_numbers<[1], [0], [0], [1], [0, 0, 1, 1], [], []>} : vector<1x8xf32>, vector<8x20xf32>, vector<1x20xf32> -> vector<1x20xf32>
    %cst_7 = arith.constant 1.250000e-01 : f32
    %13 = vector.broadcast %cst_7 : f32 to vector<1x20xf32>
    %14 = arith.mulf %12, %13 : vector<1x20xf32>
    %15 = arith.mulf %9, %9 : vector<8x20xf32>
    %cst_8 = arith.constant dense<0.000000e+00> : vector<1x20xf32>
    %16 = tpu.matmul %8, %15, %cst_8 {dimension_numbers = #tpu.dot_dimension_numbers<[1], [0], [0], [1], [0, 0, 1, 1], [], []>} : vector<1x8xf32>, vector<8x20xf32>, vector<1x20xf32> -> vector<1x20xf32>
    %cst_9 = arith.constant 1.250000e-01 : f32
    %17 = vector.broadcast %cst_9 : f32 to vector<1x20xf32>
    %18 = arith.mulf %16, %17 : vector<1x20xf32>
    %19 = arith.mulf %14, %14 : vector<1x20xf32>
    %20 = arith.subf %18, %19 : vector<1x20xf32>
    %cst_10 = arith.constant 0.000000e+00 : f32
    %21 = vector.broadcast %cst_10 : f32 to vector<1x20xf32>
    %22 = arith.maximumf %20, %21 : vector<1x20xf32>
    %23 = vector.broadcast %14 : vector<1x20xf32> to vector<8x20xf32>
    %24 = arith.subf %9, %23 : vector<8x20xf32>
    %cst_11 = arith.constant 9.99999974E-6 : f32
    %25 = vector.broadcast %cst_11 : f32 to vector<1x20xf32>
    %26 = arith.addf %22, %25 : vector<1x20xf32>
    %27 = math.rsqrt %26 : vector<1x20xf32>
    %28 = vector.broadcast %27 : vector<1x20xf32> to vector<8x20xf32>
    %29 = arith.mulf %24, %28 : vector<8x20xf32>
    %30 = vector.broadcast %10 : vector<1x20xf32> to vector<8x20xf32>
    %31 = arith.mulf %29, %30 : vector<8x20xf32>
    %32 = vector.broadcast %11 : vector<1x20xf32> to vector<8x20xf32>
    %33 = arith.addf %31, %32 : vector<8x20xf32>
    %cst_12 = arith.constant 0.000000e+00 : f32
    %34 = vector.broadcast %cst_12 : f32 to vector<8x20xf32>
    %35 = arith.maximumf %33, %34 : vector<8x20xf32>
    %cst_13 = arith.constant dense<0.000000e+00> : vector<8x10xf32>
    %36 = tpu.matmul %35, %3, %cst_13 {dimension_numbers = #tpu.dot_dimension_numbers<[1], [0], [0], [1], [0, 0, 1, 1], [], []>} : vector<8x20xf32>, vector<20x10xf32>, vector<8x10xf32> -> vector<8x10xf32>
    %37 = vector.extract_strided_slice %0 {offsets = [2, 0], sizes = [1, 10], strides = [1, 1]} : vector<9x20xf32> to vector<1x10xf32>
    %38 = vector.broadcast %37 : vector<1x10xf32> to vector<8x10xf32>
    %39 = arith.addf %36, %38 : vector<8x10xf32>
    %40 = vector.extract_strided_slice %0 {offsets = [3, 0], sizes = [1, 10], strides = [1, 1]} : vector<9x20xf32> to vector<1x10xf32>
    %41 = vector.extract_strided_slice %0 {offsets = [4, 0], sizes = [1, 10], strides = [1, 1]} : vector<9x20xf32> to vector<1x10xf32>
    %cst_14 = arith.constant dense<0.000000e+00> : vector<1x10xf32>
    %42 = tpu.matmul %8, %39, %cst_14 {dimension_numbers = #tpu.dot_dimension_numbers<[1], [0], [0], [1], [0, 0, 1, 1], [], []>} : vector<1x8xf32>, vector<8x10xf32>, vector<1x10xf32> -> vector<1x10xf32>
    %cst_15 = arith.constant 1.250000e-01 : f32
    %43 = vector.broadcast %cst_15 : f32 to vector<1x10xf32>
    %44 = arith.mulf %42, %43 : vector<1x10xf32>
    %45 = arith.mulf %39, %39 : vector<8x10xf32>
    %cst_16 = arith.constant dense<0.000000e+00> : vector<1x10xf32>
    %46 = tpu.matmul %8, %45, %cst_16 {dimension_numbers = #tpu.dot_dimension_numbers<[1], [0], [0], [1], [0, 0, 1, 1], [], []>} : vector<1x8xf32>, vector<8x10xf32>, vector<1x10xf32> -> vector<1x10xf32>
    %cst_17 = arith.constant 1.250000e-01 : f32
    %47 = vector.broadcast %cst_17 : f32 to vector<1x10xf32>
    %48 = arith.mulf %46, %47 : vector<1x10xf32>
    %49 = arith.mulf %44, %44 : vector<1x10xf32>
    %50 = arith.subf %48, %49 : vector<1x10xf32>
    %cst_18 = arith.constant 0.000000e+00 : f32
    %51 = vector.broadcast %cst_18 : f32 to vector<1x10xf32>
    %52 = arith.maximumf %50, %51 : vector<1x10xf32>
    %53 = vector.broadcast %44 : vector<1x10xf32> to vector<8x10xf32>
    %54 = arith.subf %39, %53 : vector<8x10xf32>
    %cst_19 = arith.constant 9.99999974E-6 : f32
    %55 = vector.broadcast %cst_19 : f32 to vector<1x10xf32>
    %56 = arith.addf %52, %55 : vector<1x10xf32>
    %57 = math.rsqrt %56 : vector<1x10xf32>
    %58 = vector.broadcast %57 : vector<1x10xf32> to vector<8x10xf32>
    %59 = arith.mulf %54, %58 : vector<8x10xf32>
    %60 = vector.broadcast %40 : vector<1x10xf32> to vector<8x10xf32>
    %61 = arith.mulf %59, %60 : vector<8x10xf32>
    %62 = vector.broadcast %41 : vector<1x10xf32> to vector<8x10xf32>
    %63 = arith.addf %61, %62 : vector<8x10xf32>
    %cst_20 = arith.constant 0.000000e+00 : f32
    %64 = vector.broadcast %cst_20 : f32 to vector<8x10xf32>
    %65 = arith.maximumf %63, %64 : vector<8x10xf32>
    %cst_21 = arith.constant dense<0.000000e+00> : vector<8x10xf32>
    %66 = tpu.matmul %65, %5, %cst_21 {dimension_numbers = #tpu.dot_dimension_numbers<[1], [0], [0], [1], [0, 0, 1, 1], [], []>} : vector<8x10xf32>, vector<10x10xf32>, vector<8x10xf32> -> vector<8x10xf32>
    %67 = vector.extract_strided_slice %0 {offsets = [5, 0], sizes = [1, 10], strides = [1, 1]} : vector<9x20xf32> to vector<1x10xf32>
    %68 = vector.broadcast %67 : vector<1x10xf32> to vector<8x10xf32>
    %69 = arith.addf %66, %68 : vector<8x10xf32>
    %70 = vector.extract_strided_slice %0 {offsets = [6, 0], sizes = [1, 10], strides = [1, 1]} : vector<9x20xf32> to vector<1x10xf32>
    %71 = vector.extract_strided_slice %0 {offsets = [7, 0], sizes = [1, 10], strides = [1, 1]} : vector<9x20xf32> to vector<1x10xf32>
    %cst_22 = arith.constant dense<0.000000e+00> : vector<1x10xf32>
    %72 = tpu.matmul %8, %69, %cst_22 {dimension_numbers = #tpu.dot_dimension_numbers<[1], [0], [0], [1], [0, 0, 1, 1], [], []>} : vector<1x8xf32>, vector<8x10xf32>, vector<1x10xf32> -> vector<1x10xf32>
    %cst_23 = arith.constant 1.250000e-01 : f32
    %73 = vector.broadcast %cst_23 : f32 to vector<1x10xf32>
    %74 = arith.mulf %72, %73 : vector<1x10xf32>
    %75 = arith.mulf %69, %69 : vector<8x10xf32>
    %cst_24 = arith.constant dense<0.000000e+00> : vector<1x10xf32>
    %76 = tpu.matmul %8, %75, %cst_24 {dimension_numbers = #tpu.dot_dimension_numbers<[1], [0], [0], [1], [0, 0, 1, 1], [], []>} : vector<1x8xf32>, vector<8x10xf32>, vector<1x10xf32> -> vector<1x10xf32>
    %cst_25 = arith.constant 1.250000e-01 : f32
    %77 = vector.broadcast %cst_25 : f32 to vector<1x10xf32>
    %78 = arith.mulf %76, %77 : vector<1x10xf32>
    %79 = arith.mulf %74, %74 : vector<1x10xf32>
    %80 = arith.subf %78, %79 : vector<1x10xf32>
    %cst_26 = arith.constant 0.000000e+00 : f32
    %81 = vector.broadcast %cst_26 : f32 to vector<1x10xf32>
    %82 = arith.maximumf %80, %81 : vector<1x10xf32>
    %83 = vector.broadcast %74 : vector<1x10xf32> to vector<8x10xf32>
    %84 = arith.subf %69, %83 : vector<8x10xf32>
    %cst_27 = arith.constant 9.99999974E-6 : f32
    %85 = vector.broadcast %cst_27 : f32 to vector<1x10xf32>
    %86 = arith.addf %82, %85 : vector<1x10xf32>
    %87 = math.rsqrt %86 : vector<1x10xf32>
    %88 = vector.broadcast %87 : vector<1x10xf32> to vector<8x10xf32>
    %89 = arith.mulf %84, %88 : vector<8x10xf32>
    %90 = vector.broadcast %70 : vector<1x10xf32> to vector<8x10xf32>
    %91 = arith.mulf %89, %90 : vector<8x10xf32>
    %92 = vector.broadcast %71 : vector<1x10xf32> to vector<8x10xf32>
    %93 = arith.addf %91, %92 : vector<8x10xf32>
    %cst_28 = arith.constant 0.000000e+00 : f32
    %94 = vector.broadcast %cst_28 : f32 to vector<8x10xf32>
    %95 = arith.maximumf %93, %94 : vector<8x10xf32>
    %cst_29 = arith.constant dense<0.000000e+00> : vector<8x10xf32>
    %96 = tpu.matmul %95, %7, %cst_29 {dimension_numbers = #tpu.dot_dimension_numbers<[1], [0], [0], [1], [0, 0, 1, 1], [], []>} : vector<8x10xf32>, vector<10x10xf32>, vector<8x10xf32> -> vector<8x10xf32>
    %97 = vector.extract_strided_slice %0 {offsets = [8, 0], sizes = [1, 10], strides = [1, 1]} : vector<9x20xf32> to vector<1x10xf32>
    %98 = vector.broadcast %97 : vector<1x10xf32> to vector<8x10xf32>
    %99 = arith.addf %96, %98 : vector<8x10xf32>
    %cst_30 = arith.constant dense<0xFF800000> : vector<8xf32>
    %100 = vector.multi_reduction <maximumf>, %99, %cst_30 [1] : vector<8x10xf32> to vector<8xf32>
    %101 = vector.shape_cast %100 : vector<8xf32> to vector<8x1xf32>
    %102 = vector.broadcast %101 : vector<8x1xf32> to vector<8x10xf32>
    %103 = arith.subf %99, %102 : vector<8x10xf32>
    %104 = math.exp %103 : vector<8x10xf32>
    %cst_31 = arith.constant dense<0.000000e+00> : vector<8xf32>
    %105 = vector.multi_reduction <add>, %104, %cst_31 [1] : vector<8x10xf32> to vector<8xf32>
    %106 = vector.shape_cast %105 : vector<8xf32> to vector<8x1xf32>
    %107 = math.log %106 : vector<8x1xf32>
    %108 = vector.broadcast %107 : vector<8x1xf32> to vector<8x10xf32>
    %109 = arith.subf %103, %108 : vector<8x10xf32>
    %c0_32 = arith.constant 0 : index
    %c0_33 = arith.constant 0 : index
    %110 = vector.load %arg3[%c0_32, %c0_33] : memref<8x10xf32, #tpu.memory_space<vmem>>, vector<8x10xf32>
    tpu.vector_store %arg3[%c0_32, %c0_33], %109 {strides = array<i32>} : memref<8x10xf32, #tpu.memory_space<vmem>>, vector<8x10xf32>,
    return
  }
}

</mosaic_0001>

<llo_original>
// kernel: tpu_custom_call.1
$region0: #{tpu_custom_call.1}
  #allocation0 [shape = 'u32[]', space=smem, size = 0x4, offset = 0x4, fixed_abs, tag = 'smem constant byte address 0x4 - core index']
  #allocation1 [shape = 'u32[144,128]{1,0:T(1,128)}', space=vmem, size = 0x12000, scoped, tag = 'internal scratch']
  %s0 = inlined_call_operand.vmem [shape: f32[8,20], index: 0, kind: input, shape index: {}]
  %s1 = inlined_call_operand.vmem [shape: f32[3,20,10], index: 1, kind: input, shape index: {}]
  %s2 = inlined_call_operand.vmem [shape: f32[9,20], index: 2, kind: input, shape index: {}]
  %s3 = inlined_call_operand.hbm [shape: f32[8,10], index: 3, kind: output, shape index: {}]
  %s4 = sld [smem:[#allocation0]]
  $region22: #{tpu_custom_call.1} parent=0
    _
  %s6 = ssub.s32 1, %s4
  %s7 = scalar_select 0, %s6, %s4
  $region1: #{tpu_custom_call.1} parent=0
    #allocation2 [shape = 'u8[4096]{0}', space=vmem, size = 0x1000, scoped, tag = 'output window, operand 0, single buffered']
    #allocation3 [shape = 's32[1]{0}', space=sflag, size = 0x4, scoped, tag = 'scoped memory for tpu_custom_call.1']
    %8 = vsyncpa [#allocation3], 0
    // Predicated region
    $region2: #{tpu_custom_call.1} parent=1 // pred_check
      _
    $region3: #{tpu_custom_call.1} parent=1 // pred_check_branch
      %10 = sbr.rel (0) target = $region5
    $region4: #{tpu_custom_call.1} parent=1 // pred_region
      _
    $region5: #{tpu_custom_call.1} parent=1 // pred_fallthru
      _
    // Predicated region
    $region6: #{tpu_custom_call.1} parent=1 // pred_check
      _
    $region7: #{tpu_custom_call.1} parent=1 // pred_check_branch
      %12 = sbr.rel (0) target = $region9
    $region8: #{tpu_custom_call.1} parent=1 // pred_region
      _
    $region9: #{tpu_custom_call.1} parent=1 // pred_fallthru
      _
    // Predicated region
    $region10: #{tpu_custom_call.1} parent=1 // pred_check
      _
    $region11: #{tpu_custom_call.1} parent=1 // pred_check_branch
      %14 = sbr.rel (0) target = $region13
    $region12: #{tpu_custom_call.1} parent=1 // pred_region
      _
    $region13: #{tpu_custom_call.1} parent=1 // pred_fallthru
      _
    %v15 = vld [vmem:[%s2] sm:$0xff]
    %v16 = vld [vmem:[%s2 + $0x8] sm:$0x1]
    %v17 = vld [vmem:[%s1] sm:$0xff]
    %v18 = vld [vmem:[%s1 + $0x8] sm:$0xff]
    %v19 = vld [vmem:[%s1 + $0x10] sm:$0xf]
    %v20 = vld [vmem:[%s1 + $0x18] sm:$0xff]
    %v21 = vld [vmem:[%s1 + $0x20] sm:$0xff]
    %v22 = vld [vmem:[%s1 + $0x30] sm:$0xff]
    %v23 = vld [vmem:[%s1 + $0x38] sm:$0xff]
    %v24 = vld [vmem:[%s0] sm:$0xff]
    %vm25 = vcmask 64512
    %v27 = vsel %vm25, 1.0, 0
    %29 = vmatprep.subr.mxu0 0.0
    %30 = vmatpush1.msra.mxu0 %v24
    %31 = vmatprep.subr.mxu0 0.0
    %32 = vmatpush1.msra.mxu0 0.0
    %33 = vmatprep.subr.mxu0 0.0
    %34 = vmatpush1.msra.mxu0 0.0
    %35 = vmatprep.subr.mxu0 0.0
    %36 = vmatpush1.msra.mxu0 0.0
    %37 = vmatprep.subr.mxu0 0.0
    %38 = vmatpush1.msra.mxu0 0.0
    %39 = vmatprep.subr.mxu0 0.0
    %40 = vmatpush1.msra.mxu0 0.0
    %41 = vmatprep.subr.mxu0 0.0
    %42 = vmatpush1.msra.mxu0 0.0
    %43 = vmatprep.subr.mxu0 0.0
    %44 = vmatpush1.msra.mxu0 0.0
    %45 = vmatprep.subr.mxu0 0.0
    %46 = vmatpush1.msra.mxu0 0.0
    %47 = vmatprep.subr.mxu0 0.0
    %48 = vmatpush1.msra.mxu0 0.0
    %49 = vmatprep.subr.mxu0 0.0
    %50 = vmatpush1.msra.mxu0 0.0
    %51 = vmatprep.subr.mxu0 0.0
    %52 = vmatpush1.msra.mxu0 0.0
    %53 = vmatprep.subr.mxu0 0.0
    %54 = vmatpush1.msra.mxu0 0.0
    %55 = vmatprep.subr.mxu0 0.0
    %56 = vmatpush1.msra.mxu0 0.0
    %57 = vmatprep.subr.mxu0 0.0
    %58 = vmatpush1.msra.mxu0 0.0
    %59 = vmatprep.subr.mxu0 0.0
    %60 = vmatpush1.msra.mxu0 0.0
    %61 = vmatprep.subr.mxu0 0.0
    %62 = vmatpush1.msra.mxu0 0.0
    %63 = vmatprep.subr.mxu0 0.0
    %64 = vmatpush1.msra.mxu0 0.0
    %65 = vmatprep.subr.mxu0 0.0
    %66 = vmatpush1.msra.mxu0 0.0
    %67 = vmatprep.subr.mxu0 0.0
    %68 = vmatpush1.msra.mxu0 0.0
    %69 = vmatprep.subr.mxu0 0.0
    %70 = vmatpush1.msra.mxu0 0.0
    %71 = vmatprep.subr.mxu0 0.0
    %72 = vmatpush1.msra.mxu0 0.0
    %73 = vmatprep.subr.mxu0 0.0
    %74 = vmatpush1.msra.mxu0 0.0
    %75 = vmatprep.subr.mxu0 0.0
    %76 = vmatpush1.msra.mxu0 0.0
    %77 = vmatprep.subr.mxu0 0.0
    %78 = vmatpush1.msra.mxu0 0.0
    %79 = vmatprep.subr.mxu0 0.0
    %80 = vmatpush1.msra.mxu0 0.0
    %81 = vmatprep.subr.mxu0 0.0
    %82 = vmatpush1.msra.mxu0 0.0
    %83 = vmatprep.subr.mxu0 0.0
    %84 = vmatpush1.msra.mxu0 0.0
    %85 = vmatprep.subr.mxu0 0.0
    %86 = vmatpush1.msra.mxu0 0.0
    %87 = vmatprep.subr.mxu0 0.0
    %88 = vmatpush1.msra.mxu0 0.0
    %89 = vmatprep.subr.mxu0 0.0
    %90 = vmatpush1.msra.mxu0 0.0
    %91 = vmatprep.subr.mxu0 0.0
    %92 = vmatpush1.msra.mxu0 0.0
    %93 = vmatprep.mubr.f32.mxu0 0.0
    %94 = vmatmul.mubr.f32.gmra.mrb[0].mxu0 %v27
    %v95 = vpop.f32.mrb[0].mxu0
    %v96 = vadd.f32 0.0, %v95
    %v97 = vpop.f32.mrb[0].mxu0
    %98 = vdwg.mxu0
    %v99 = vmul.f32 %v96, 0.125
    %v100 = vmul.f32 %v24, %v24
    %101 = vmatprep.subr.mxu0 0.0
    %102 = vmatpush1.msra.mxu0 %v100
    %103 = vmatprep.subr.mxu0 0.0
    %104 = vmatpush1.msra.mxu0 0.0
    %105 = vmatprep.subr.mxu0 0.0
    %106 = vmatpush1.msra.mxu0 0.0
    %107 = vmatprep.subr.mxu0 0.0
    %108 = vmatpush1.msra.mxu0 0.0
    %109 = vmatprep.subr.mxu0 0.0
    %110 = vmatpush1.msra.mxu0 0.0
    %111 = vmatprep.subr.mxu0 0.0
    %112 = vmatpush1.msra.mxu0 0.0
    %113 = vmatprep.subr.mxu0 0.0
    %114 = vmatpush1.msra.mxu0 0.0
    %115 = vmatprep.subr.mxu0 0.0
    %116 = vmatpush1.msra.mxu0 0.0
    %117 = vmatprep.subr.mxu0 0.0
    %118 = vmatpush1.msra.mxu0 0.0
    %119 = vmatprep.subr.mxu0 0.0
    %120 = vmatpush1.msra.mxu0 0.0
    %121 = vmatprep.subr.mxu0 0.0
    %122 = vmatpush1.msra.mxu0 0.0
    %123 = vmatprep.subr.mxu0 0.0
    %124 = vmatpush1.msra.mxu0 0.0
    %125 = vmatprep.subr.mxu0 0.0
    %126 = vmatpush1.msra.mxu0 0.0
    %127 = vmatprep.subr.mxu0 0.0
    %128 = vmatpush1.msra.mxu0 0.0
    %129 = vmatprep.subr.mxu0 0.0
    %130 = vmatpush1.msra.mxu0 0.0
    %131 = vmatprep.subr.mxu0 0.0
    %132 = vmatpush1.msra.mxu0 0.0
    %133 = vmatprep.subr.mxu0 0.0
    %134 = vmatpush1.msra.mxu0 0.0
    %135 = vmatprep.subr.mxu0 0.0
    %136 = vmatpush1.msra.mxu0 0.0
    %137 = vmatprep.subr.mxu0 0.0
    %138 = vmatpush1.msra.mxu0 0.0
    %139 = vmatprep.subr.mxu0 0.0
    %140 = vmatpush1.msra.mxu0 0.0
    %141 = vmatprep.subr.mxu0 0.0
    %142 = vmatpush1.msra.mxu0 0.0
    %143 = vmatprep.subr.mxu0 0.0
    %144 = vmatpush1.msra.mxu0 0.0
    %145 = vmatprep.subr.mxu0 0.0
    %146 = vmatpush1.msra.mxu0 0.0
    %147 = vmatprep.subr.mxu0 0.0
    %148 = vmatpush1.msra.mxu0 0.0
    %149 = vmatprep.subr.mxu0 0.0
    %150 = vmatpush1.msra.mxu0 0.0
    %151 = vmatprep.subr.mxu0 0.0
    %152 = vmatpush1.msra.mxu0 0.0
    %153 = vmatprep.subr.mxu0 0.0
    %154 = vmatpush1.msra.mxu0 0.0
    %155 = vmatprep.subr.mxu0 0.0
    %156 = vmatpush1.msra.mxu0 0.0
    %157 = vmatprep.subr.mxu0 0.0
    %158 = vmatpush1.msra.mxu0 0.0
    %159 = vmatprep.subr.mxu0 0.0
    %160 = vmatpush1.msra.mxu0 0.0
    %161 = vmatprep.subr.mxu0 0.0
    %162 = vmatpush1.msra.mxu0 0.0
    %163 = vmatprep.subr.mxu0 0.0
    %164 = vmatpush1.msra.mxu0 0.0
    %165 = vmatprep.mubr.f32.mxu0 0.0
    %166 = vmatmul.mubr.f32.gmra.mrb[0].mxu0 %v27
    %v167 = vpop.f32.mrb[0].mxu0
    %v168 = vadd.f32 0.0, %v167
    %v169 = vpop.f32.mrb[0].mxu0
    %170 = vdwg.mxu0
    %v171 = vmul.f32 %v168, 0.125
    %v172 = vmul.f32 %v99, %v99
    %v173 = vsub.f32 %v171, %v172
    %v174 = vmax.f32 %v173, 0.0
    %v175 = vlaneseq
    %v176 = vshrl.u32 %v175, 7
    %v177 = vsub.s32 0, %v176
    %v178 = vrot.slane %v99, %v177
    %v179 = vsub.f32 %v24, %v178
    %v180 = vadd.f32 %v174, 1e-05
    %v181 = vrsqrt.pop %v180
    %v182 = vlaneseq
    %v183 = vshrl.u32 %v182, 7
    %v184 = vsub.s32 0, %v183
    %v185 = vrot.slane %v181, %v184
    %v186 = vmul.f32 %v179, %v185
    %v187 = vlaneseq
    %v188 = vshrl.u32 %v187, 7
    %v189 = vsub.s32 0, %v188
    %v190 = vrot.slane %v15, %v189
    %v191 = vmul.f32 %v186, %v190
    %v192 = vlaneseq
    %v193 = vshrl.u32 %v192, 7
    %v194 = vsub.s32 1, %v193
    %v195 = vrot.slane %v15, %v194
    %v196 = vadd.f32 %v191, %v195
    %v197 = vmax.f32 %v196, 0.0
    %v198 = vlaneseq
    %v199 = vshrl.u32 %v198, 7
    %v200 = vsub.s32 2, %v199
    %v201 = vrot.slane %v15, %v200
    %vm202 = vcmask 162816
    %v204 = vsel %vm202, %v197, 0
    %vm206 = vcmask 1043456
    %v208 = vsel %vm206, %v19, 0
    %210 = vmatprep.subr.mxu0 0.0
    %211 = vmatpush1.msra.mxu0 %v17
    %212 = vmatprep.subr.mxu0 0.0
    %213 = vmatpush1.msra.mxu0 %v18
    %214 = vmatprep.subr.mxu0 0.0
    %215 = vmatpush1.msra.mxu0 %v208
    %216 = vmatprep.subr.mxu0 0.0
    %217 = vmatpush1.msra.mxu0 0.0
    %218 = vmatprep.subr.mxu0 0.0
    %219 = vmatpush1.msra.mxu0 0.0
    %220 = vmatprep.subr.mxu0 0.0
    %221 = vmatpush1.msra.mxu0 0.0
    %222 = vmatprep.subr.mxu0 0.0
    %223 = vmatpush1.msra.mxu0 0.0
    %224 = vmatprep.subr.mxu0 0.0
    %225 = vmatpush1.msra.mxu0 0.0
    %226 = vmatprep.subr.mxu0 0.0
    %227 = vmatpush1.msra.mxu0 0.0
    %228 = vmatprep.subr.mxu0 0.0
    %229 = vmatpush1.msra.mxu0 0.0
    %230 = vmatprep.subr.mxu0 0.0
    %231 = vmatpush1.msra.mxu0 0.0
    %232 = vmatprep.subr.mxu0 0.0
    %233 = vmatpush1.msra.mxu0 0.0
    %234 = vmatprep.subr.mxu0 0.0
    %235 = vmatpush1.msra.mxu0 0.0
    %236 = vmatprep.subr.mxu0 0.0
    %237 = vmatpush1.msra.mxu0 0.0
    %238 = vmatprep.subr.mxu0 0.0
    %239 = vmatpush1.msra.mxu0 0.0
    %240 = vmatprep.subr.mxu0 0.0
    %241 = vmatpush1.msra.mxu0 0.0
    %242 = vmatprep.subr.mxu0 0.0
    %243 = vmatpush1.msra.mxu0 0.0
    %244 = vmatprep.subr.mxu0 0.0
    %245 = vmatpush1.msra.mxu0 0.0
    %246 = vmatprep.subr.mxu0 0.0
    %247 = vmatpush1.msra.mxu0 0.0
    %248 = vmatprep.subr.mxu0 0.0
    %249 = vmatpush1.msra.mxu0 0.0
    %250 = vmatprep.subr.mxu0 0.0
    %251 = vmatpush1.msra.mxu0 0.0
    %252 = vmatprep.subr.mxu0 0.0
    %253 = vmatpush1.msra.mxu0 0.0
    %254 = vmatprep.subr.mxu0 0.0
    %255 = vmatpush1.msra.mxu0 0.0
    %256 = vmatprep.subr.mxu0 0.0
    %257 = vmatpush1.msra.mxu0 0.0
    %258 = vmatprep.subr.mxu0 0.0
    %259 = vmatpush1.msra.mxu0 0.0
    %260 = vmatprep.subr.mxu0 0.0
    %261 = vmatpush1.msra.mxu0 0.0
    %262 = vmatprep.subr.mxu0 0.0
    %263 = vmatpush1.msra.mxu0 0.0
    %264 = vmatprep.subr.mxu0 0.0
    %265 = vmatpush1.msra.mxu0 0.0
    %266 = vmatprep.subr.mxu0 0.0
    %267 = vmatpush1.msra.mxu0 0.0
    %268 = vmatprep.subr.mxu0 0.0
    %269 = vmatpush1.msra.mxu0 0.0
    %270 = vmatprep.subr.mxu0 0.0
    %271 = vmatpush1.msra.mxu0 0.0
    %272 = vmatprep.subr.mxu0 0.0
    %273 = vmatpush1.msra.mxu0 0.0
    %274 = vmatprep.mubr.f32.mxu0 0.0
    %275 = vmatmul.mubr.f32.gmra.mrb[0].mxu0 %v204
    %v276 = vpop.f32.mrb[0].mxu0
    %v277 = vadd.f32 %v201, %v276
    %v278 = vpop.f32.mrb[0].mxu0
    %279 = vdwg.mxu0
    %280 = vmatprep.subr.mxu0 0.0
    %281 = vmatpush1.msra.mxu0 %v277
    %282 = vmatprep.subr.mxu0 0.0
    %283 = vmatpush1.msra.mxu0 0.0
    %284 = vmatprep.subr.mxu0 0.0
    %285 = vmatpush1.msra.mxu0 0.0
    %286 = vmatprep.subr.mxu0 0.0
    %287 = vmatpush1.msra.mxu0 0.0
    %288 = vmatprep.subr.mxu0 0.0
    %289 = vmatpush1.msra.mxu0 0.0
    %290 = vmatprep.subr.mxu0 0.0
    %291 = vmatpush1.msra.mxu0 0.0
    %292 = vmatprep.subr.mxu0 0.0
    %293 = vmatpush1.msra.mxu0 0.0
    %294 = vmatprep.subr.mxu0 0.0
    %295 = vmatpush1.msra.mxu0 0.0
    %296 = vmatprep.subr.mxu0 0.0
    %297 = vmatpush1.msra.mxu0 0.0
    %298 = vmatprep.subr.mxu0 0.0
    %299 = vmatpush1.msra.mxu0 0.0
    %300 = vmatprep.subr.mxu0 0.0
    %301 = vmatpush1.msra.mxu0 0.0
    %302 = vmatprep.subr.mxu0 0.0
    %303 = vmatpush1.msra.mxu0 0.0
    %304 = vmatprep.subr.mxu0 0.0
    %305 = vmatpush1.msra.mxu0 0.0
    %306 = vmatprep.subr.mxu0 0.0
    %307 = vmatpush1.msra.mxu0 0.0
    %308 = vmatprep.subr.mxu0 0.0
    %309 = vmatpush1.msra.mxu0 0.0
    %310 = vmatprep.subr.mxu0 0.0
    %311 = vmatpush1.msra.mxu0 0.0
    %312 = vmatprep.subr.mxu0 0.0
    %313 = vmatpush1.msra.mxu0 0.0
    %314 = vmatprep.subr.mxu0 0.0
    %315 = vmatpush1.msra.mxu0 0.0
    %316 = vmatprep.subr.mxu0 0.0
    %317 = vmatpush1.msra.mxu0 0.0
    %318 = vmatprep.subr.mxu0 0.0
    %319 = vmatpush1.msra.mxu0 0.0
    %320 = vmatprep.subr.mxu0 0.0
    %321 = vmatpush1.msra.mxu0 0.0
    %322 = vmatprep.subr.mxu0 0.0
    %323 = vmatpush1.msra.mxu0 0.0
    %324 = vmatprep.subr.mxu0 0.0
    %325 = vmatpush1.msra.mxu0 0.0
    %326 = vmatprep.subr.mxu0 0.0
    %327 = vmatpush1.msra.mxu0 0.0
    %328 = vmatprep.subr.mxu0 0.0
    %329 = vmatpush1.msra.mxu0 0.0
    %330 = vmatprep.subr.mxu0 0.0
    %331 = vmatpush1.msra.mxu0 0.0
    %332 = vmatprep.subr.mxu0 0.0
    %333 = vmatpush1.msra.mxu0 0.0
    %334 = vmatprep.subr.mxu0 0.0
    %335 = vmatpush1.msra.mxu0 0.0
    %336 = vmatprep.subr.mxu0 0.0
    %337 = vmatpush1.msra.mxu0 0.0
    %338 = vmatprep.subr.mxu0 0.0
    %339 = vmatpush1.msra.mxu0 0.0
    %340 = vmatprep.subr.mxu0 0.0
    %341 = vmatpush1.msra.mxu0 0.0
    %342 = vmatprep.subr.mxu0 0.0
    %343 = vmatpush1.msra.mxu0 0.0
    %344 = vmatprep.mubr.f32.mxu0 0.0
    %345 = vmatmul.mubr.f32.gmra.mrb[0].mxu0 %v27
    %v346 = vpop.f32.mrb[0].mxu0
    %v347 = vadd.f32 0.0, %v346
    %v348 = vpop.f32.mrb[0].mxu0
    %349 = vdwg.mxu0
    %v350 = vmul.f32 %v347, 0.125
    %v351 = vmul.f32 %v277, %v277
    %352 = vmatprep.subr.mxu0 0.0
    %353 = vmatpush1.msra.mxu0 %v351
    %354 = vmatprep.subr.mxu0 0.0
    %355 = vmatpush1.msra.mxu0 0.0
    %356 = vmatprep.subr.mxu0 0.0
    %357 = vmatpush1.msra.mxu0 0.0
    %358 = vmatprep.subr.mxu0 0.0
    %359 = vmatpush1.msra.mxu0 0.0
    %360 = vmatprep.subr.mxu0 0.0
    %361 = vmatpush1.msra.mxu0 0.0
    %362 = vmatprep.subr.mxu0 0.0
    %363 = vmatpush1.msra.mxu0 0.0
    %364 = vmatprep.subr.mxu0 0.0
    %365 = vmatpush1.msra.mxu0 0.0
    %366 = vmatprep.subr.mxu0 0.0
    %367 = vmatpush1.msra.mxu0 0.0
    %368 = vmatprep.subr.mxu0 0.0
    %369 = vmatpush1.msra.mxu0 0.0
    %370 = vmatprep.subr.mxu0 0.0
    %371 = vmatpush1.msra.mxu0 0.0
    %372 = vmatprep.subr.mxu0 0.0
    %373 = vmatpush1.msra.mxu0 0.0
    %374 = vmatprep.subr.mxu0 0.0
    %375 = vmatpush1.msra.mxu0 0.0
    %376 = vmatprep.subr.mxu0 0.0
    %377 = vmatpush1.msra.mxu0 0.0
    %378 = vmatprep.subr.mxu0 0.0
    %379 = vmatpush1.msra.mxu0 0.0
    %380 = vmatprep.subr.mxu0 0.0
    %381 = vmatpush1.msra.mxu0 0.0
    %382 = vmatprep.subr.mxu0 0.0
    %383 = vmatpush1.msra.mxu0 0.0
    %384 = vmatprep.subr.mxu0 0.0
    %385 = vmatpush1.msra.mxu0 0.0
    %386 = vmatprep.subr.mxu0 0.0
    %387 = vmatpush1.msra.mxu0 0.0
    %388 = vmatprep.subr.mxu0 0.0
    %389 = vmatpush1.msra.mxu0 0.0
    %390 = vmatprep.subr.mxu0 0.0
    %391 = vmatpush1.msra.mxu0 0.0
    %392 = vmatprep.subr.mxu0 0.0
    %393 = vmatpush1.msra.mxu0 0.0
    %394 = vmatprep.subr.mxu0 0.0
    %395 = vmatpush1.msra.mxu0 0.0
    %396 = vmatprep.subr.mxu0 0.0
    %397 = vmatpush1.msra.mxu0 0.0
    %398 = vmatprep.subr.mxu0 0.0
    %399 = vmatpush1.msra.mxu0 0.0
    %400 = vmatprep.subr.mxu0 0.0
    %401 = vmatpush1.msra.mxu0 0.0
    %402 = vmatprep.subr.mxu0 0.0
    %403 = vmatpush1.msra.mxu0 0.0
    %404 = vmatprep.subr.mxu0 0.0
    %405 = vmatpush1.msra.mxu0 0.0
    %406 = vmatprep.subr.mxu0 0.0
    %407 = vmatpush1.msra.mxu0 0.0
    %408 = vmatprep.subr.mxu0 0.0
    %409 = vmatpush1.msra.mxu0 0.0
    %410 = vmatprep.subr.mxu0 0.0
    %411 = vmatpush1.msra.mxu0 0.0
    %412 = vmatprep.subr.mxu0 0.0
    %413 = vmatpush1.msra.mxu0 0.0
    %414 = vmatprep.subr.mxu0 0.0
    %415 = vmatpush1.msra.mxu0 0.0
    %416 = vmatprep.mubr.f32.mxu0 0.0
    %417 = vmatmul.mubr.f32.gmra.mrb[0].mxu0 %v27
    %v418 = vpop.f32.mrb[0].mxu0
    %v419 = vadd.f32 0.0, %v418
    %v420 = vpop.f32.mrb[0].mxu0
    %421 = vdwg.mxu0
    %v422 = vmul.f32 %v419, 0.125
    %v423 = vmul.f32 %v350, %v350
    %v424 = vsub.f32 %v422, %v423
    %v425 = vmax.f32 %v424, 0.0
    %v426 = vlaneseq
    %v427 = vshrl.u32 %v426, 7
    %v428 = vsub.s32 0, %v427
    %v429 = vrot.slane %v350, %v428
    %v430 = vsub.f32 %v277, %v429
    %v431 = vadd.f32 %v425, 1e-05
    %v432 = vrsqrt.pop %v431
    %v433 = vlaneseq
    %v434 = vshrl.u32 %v433, 7
    %v435 = vsub.s32 0, %v434
    %v436 = vrot.slane %v432, %v435
    %v437 = vmul.f32 %v430, %v436
    %v438 = vlaneseq
    %v439 = vshrl.u32 %v438, 7
    %v440 = vsub.s32 3, %v439
    %v441 = vrot.slane %v15, %v440
    %v442 = vmul.f32 %v437, %v441
    %v443 = vlaneseq
    %v444 = vshrl.u32 %v443, 7
    %v445 = vsub.s32 4, %v444
    %v446 = vrot.slane %v15, %v445
    %v447 = vadd.f32 %v442, %v446
    %v448 = vmax.f32 %v447, 0.0
    %v449 = vlaneseq
    %v450 = vshrl.u32 %v449, 7
    %v451 = vsub.s32 5, %v450
    %v452 = vrot.slane %v15, %v451
    %vm453 = vcmask 80896
    %v455 = vsel %vm453, %v448, 0
    %vm457 = vcmask 1041408
    %v459 = vsel %vm457, %v21, 0
    %461 = vmatprep.subr.mxu0 0.0
    %462 = vmatpush1.msra.mxu0 %v20
    %463 = vmatprep.subr.mxu0 0.0
    %464 = vmatpush1.msra.mxu0 %v459
    %465 = vmatprep.subr.mxu0 0.0
    %466 = vmatpush1.msra.mxu0 0.0
    %467 = vmatprep.subr.mxu0 0.0
    %468 = vmatpush1.msra.mxu0 0.0
    %469 = vmatprep.subr.mxu0 0.0
    %470 = vmatpush1.msra.mxu0 0.0
    %471 = vmatprep.subr.mxu0 0.0
    %472 = vmatpush1.msra.mxu0 0.0
    %473 = vmatprep.subr.mxu0 0.0
    %474 = vmatpush1.msra.mxu0 0.0
    %475 = vmatprep.subr.mxu0 0.0
    %476 = vmatpush1.msra.mxu0 0.0
    %477 = vmatprep.subr.mxu0 0.0
    %478 = vmatpush1.msra.mxu0 0.0
    %479 = vmatprep.subr.mxu0 0.0
    %480 = vmatpush1.msra.mxu0 0.0
    %481 = vmatprep.subr.mxu0 0.0
    %482 = vmatpush1.msra.mxu0 0.0
    %483 = vmatprep.subr.mxu0 0.0
    %484 = vmatpush1.msra.mxu0 0.0
    %485 = vmatprep.subr.mxu0 0.0
    %486 = vmatpush1.msra.mxu0 0.0
    %487 = vmatprep.subr.mxu0 0.0
    %488 = vmatpush1.msra.mxu0 0.0
    %489 = vmatprep.subr.mxu0 0.0
    %490 = vmatpush1.msra.mxu0 0.0
    %491 = vmatprep.subr.mxu0 0.0
    %492 = vmatpush1.msra.mxu0 0.0
    %493 = vmatprep.subr.mxu0 0.0
    %494 = vmatpush1.msra.mxu0 0.0
    %495 = vmatprep.subr.mxu0 0.0
    %496 = vmatpush1.msra.mxu0 0.0
    %497 = vmatprep.subr.mxu0 0.0
    %498 = vmatpush1.msra.mxu0 0.0
    %499 = vmatprep.subr.mxu0 0.0
    %500 = vmatpush1.msra.mxu0 0.0
    %501 = vmatprep.subr.mxu0 0.0
    %502 = vmatpush1.msra.mxu0 0.0
    %503 = vmatprep.subr.mxu0 0.0
    %504 = vmatpush1.msra.mxu0 0.0
    %505 = vmatprep.subr.mxu0 0.0
    %506 = vmatpush1.msra.mxu0 0.0
    %507 = vmatprep.subr.mxu0 0.0
    %508 = vmatpush1.msra.mxu0 0.0
    %509 = vmatprep.subr.mxu0 0.0
    %510 = vmatpush1.msra.mxu0 0.0
    %511 = vmatprep.subr.mxu0 0.0
    %512 = vmatpush1.msra.mxu0 0.0
    %513 = vmatprep.subr.mxu0 0.0
    %514 = vmatpush1.msra.mxu0 0.0
    %515 = vmatprep.subr.mxu0 0.0
    %516 = vmatpush1.msra.mxu0 0.0
    %517 = vmatprep.subr.mxu0 0.0
    %518 = vmatpush1.msra.mxu0 0.0
    %519 = vmatprep.subr.mxu0 0.0
    %520 = vmatpush1.msra.mxu0 0.0
    %521 = vmatprep.subr.mxu0 0.0
    %522 = vmatpush1.msra.mxu0 0.0
    %523 = vmatprep.subr.mxu0 0.0
    %524 = vmatpush1.msra.mxu0 0.0
    %525 = vmatprep.mubr.f32.mxu0 0.0
    %526 = vmatmul.mubr.f32.gmra.mrb[0].mxu0 %v455
    %v527 = vpop.f32.mrb[0].mxu0
    %v528 = vadd.f32 %v452, %v527
    %v529 = vpop.f32.mrb[0].mxu0
    %530 = vdwg.mxu0
    %531 = vmatprep.subr.mxu0 0.0
    %532 = vmatpush1.msra.mxu0 %v528
    %533 = vmatprep.subr.mxu0 0.0
    %534 = vmatpush1.msra.mxu0 0.0
    %535 = vmatprep.subr.mxu0 0.0
    %536 = vmatpush1.msra.mxu0 0.0
    %537 = vmatprep.subr.mxu0 0.0
    %538 = vmatpush1.msra.mxu0 0.0
    %539 = vmatprep.subr.mxu0 0.0
    %540 = vmatpush1.msra.mxu0 0.0
    %541 = vmatprep.subr.mxu0 0.0
    %542 = vmatpush1.msra.mxu0 0.0
    %543 = vmatprep.subr.mxu0 0.0
    %544 = vmatpush1.msra.mxu0 0.0
    %545 = vmatprep.subr.mxu0 0.0
    %546 = vmatpush1.msra.mxu0 0.0
    %547 = vmatprep.subr.mxu0 0.0
    %548 = vmatpush1.msra.mxu0 0.0
    %549 = vmatprep.subr.mxu0 0.0
    %550 = vmatpush1.msra.mxu0 0.0
    %551 = vmatprep.subr.mxu0 0.0
    %552 = vmatpush1.msra.mxu0 0.0
    %553 = vmatprep.subr.mxu0 0.0
    %554 = vmatpush1.msra.mxu0 0.0
    %555 = vmatprep.subr.mxu0 0.0
    %556 = vmatpush1.msra.mxu0 0.0
    %557 = vmatprep.subr.mxu0 0.0
    %558 = vmatpush1.msra.mxu0 0.0
    %559 = vmatprep.subr.mxu0 0.0
    %560 = vmatpush1.msra.mxu0 0.0
    %561 = vmatprep.subr.mxu0 0.0
    %562 = vmatpush1.msra.mxu0 0.0
    %563 = vmatprep.subr.mxu0 0.0
    %564 = vmatpush1.msra.mxu0 0.0
    %565 = vmatprep.subr.mxu0 0.0
    %566 = vmatpush1.msra.mxu0 0.0
    %567 = vmatprep.subr.mxu0 0.0
    %568 = vmatpush1.msra.mxu0 0.0
    %569 = vmatprep.subr.mxu0 0.0
    %570 = vmatpush1.msra.mxu0 0.0
    %571 = vmatprep.subr.mxu0 0.0
    %572 = vmatpush1.msra.mxu0 0.0
    %573 = vmatprep.subr.mxu0 0.0
    %574 = vmatpush1.msra.mxu0 0.0
    %575 = vmatprep.subr.mxu0 0.0
    %576 = vmatpush1.msra.mxu0 0.0
    %577 = vmatprep.subr.mxu0 0.0
    %578 = vmatpush1.msra.mxu0 0.0
    %579 = vmatprep.subr.mxu0 0.0
    %580 = vmatpush1.msra.mxu0 0.0
    %581 = vmatprep.subr.mxu0 0.0
    %582 = vmatpush1.msra.mxu0 0.0
    %583 = vmatprep.subr.mxu0 0.0
    %584 = vmatpush1.msra.mxu0 0.0
    %585 = vmatprep.subr.mxu0 0.0
    %586 = vmatpush1.msra.mxu0 0.0
    %587 = vmatprep.subr.mxu0 0.0
    %588 = vmatpush1.msra.mxu0 0.0
    %589 = vmatprep.subr.mxu0 0.0
    %590 = vmatpush1.msra.mxu0 0.0
    %591 = vmatprep.subr.mxu0 0.0
    %592 = vmatpush1.msra.mxu0 0.0
    %593 = vmatprep.subr.mxu0 0.0
    %594 = vmatpush1.msra.mxu0 0.0
    %595 = vmatprep.mubr.f32.mxu0 0.0
    %596 = vmatmul.mubr.f32.gmra.mrb[0].mxu0 %v27
    %v597 = vpop.f32.mrb[0].mxu0
    %v598 = vadd.f32 0.0, %v597
    %v599 = vpop.f32.mrb[0].mxu0
    %600 = vdwg.mxu0
    %v601 = vmul.f32 %v598, 0.125
    %v602 = vmul.f32 %v528, %v528
    %603 = vmatprep.subr.mxu0 0.0
    %604 = vmatpush1.msra.mxu0 %v602
    %605 = vmatprep.subr.mxu0 0.0
    %606 = vmatpush1.msra.mxu0 0.0
    %607 = vmatprep.subr.mxu0 0.0
    %608 = vmatpush1.msra.mxu0 0.0
    %609 = vmatprep.subr.mxu0 0.0
    %610 = vmatpush1.msra.mxu0 0.0
    %611 = vmatprep.subr.mxu0 0.0
    %612 = vmatpush1.msra.mxu0 0.0
    %613 = vmatprep.subr.mxu0 0.0
    %614 = vmatpush1.msra.mxu0 0.0
    %615 = vmatprep.subr.mxu0 0.0
    %616 = vmatpush1.msra.mxu0 0.0
    %617 = vmatprep.subr.mxu0 0.0
    %618 = vmatpush1.msra.mxu0 0.0
    %619 = vmatprep.subr.mxu0 0.0
    %620 = vmatpush1.msra.mxu0 0.0
    %621 = vmatprep.subr.mxu0 0.0
    %622 = vmatpush1.msra.mxu0 0.0
    %623 = vmatprep.subr.mxu0 0.0
    %624 = vmatpush1.msra.mxu0 0.0
    %625 = vmatprep.subr.mxu0 0.0
    %626 = vmatpush1.msra.mxu0 0.0
    %627 = vmatprep.subr.mxu0 0.0
    %628 = vmatpush1.msra.mxu0 0.0
    %629 = vmatprep.subr.mxu0 0.0
    %630 = vmatpush1.msra.mxu0 0.0
    %631 = vmatprep.subr.mxu0 0.0
    %632 = vmatpush1.msra.mxu0 0.0
    %633 = vmatprep.subr.mxu0 0.0
    %634 = vmatpush1.msra.mxu0 0.0
    %635 = vmatprep.subr.mxu0 0.0
    %636 = vmatpush1.msra.mxu0 0.0
    %637 = vmatprep.subr.mxu0 0.0
    %638 = vmatpush1.msra.mxu0 0.0
    %639 = vmatprep.subr.mxu0 0.0
    %640 = vmatpush1.msra.mxu0 0.0
    %641 = vmatprep.subr.mxu0 0.0
    %642 = vmatpush1.msra.mxu0 0.0
    %643 = vmatprep.subr.mxu0 0.0
    %644 = vmatpush1.msra.mxu0 0.0
    %645 = vmatprep.subr.mxu0 0.0
    %646 = vmatpush1.msra.mxu0 0.0
    %647 = vmatprep.subr.mxu0 0.0
    %648 = vmatpush1.msra.mxu0 0.0
    %649 = vmatprep.subr.mxu0 0.0
    %650 = vmatpush1.msra.mxu0 0.0
    %651 = vmatprep.subr.mxu0 0.0
    %652 = vmatpush1.msra.mxu0 0.0
    %653 = vmatprep.subr.mxu0 0.0
    %654 = vmatpush1.msra.mxu0 0.0
    %655 = vmatprep.subr.mxu0 0.0
    %656 = vmatpush1.msra.mxu0 0.0
    %657 = vmatprep.subr.mxu0 0.0
    %658 = vmatpush1.msra.mxu0 0.0
    %659 = vmatprep.subr.mxu0 0.0
    %660 = vmatpush1.msra.mxu0 0.0
    %661 = vmatprep.subr.mxu0 0.0
    %662 = vmatpush1.msra.mxu0 0.0
    %663 = vmatprep.subr.mxu0 0.0
    %664 = vmatpush1.msra.mxu0 0.0
    %665 = vmatprep.subr.mxu0 0.0
    %666 = vmatpush1.msra.mxu0 0.0
    %667 = vmatprep.mubr.f32.mxu0 0.0
    %668 = vmatmul.mubr.f32.gmra.mrb[0].mxu0 %v27
    %v669 = vpop.f32.mrb[0].mxu0
    %v670 = vadd.f32 0.0, %v669
    %v671 = vpop.f32.mrb[0].mxu0
    %672 = vdwg.mxu0
    %v673 = vmul.f32 %v670, 0.125
    %v674 = vmul.f32 %v601, %v601
    %v675 = vsub.f32 %v673, %v674
    %v676 = vmax.f32 %v675, 0.0
    %v677 = vlaneseq
    %v678 = vshrl.u32 %v677, 7
    %v679 = vsub.s32 0, %v678
    %v680 = vrot.slane %v601, %v679
    %v681 = vsub.f32 %v528, %v680
    %v682 = vadd.f32 %v676, 1e-05
    %v683 = vrsqrt.pop %v682
    %v684 = vlaneseq
    %v685 = vshrl.u32 %v684, 7
    %v686 = vsub.s32 0, %v685
    %v687 = vrot.slane %v683, %v686
    %v688 = vmul.f32 %v681, %v687
    %v689 = vlaneseq
    %v690 = vshrl.u32 %v689, 7
    %v691 = vsub.s32 6, %v690
    %v692 = vrot.slane %v15, %v691
    %v693 = vmul.f32 %v688, %v692
    %v694 = vlaneseq
    %v695 = vshrl.u32 %v694, 7
    %v696 = vsub.s32 7, %v695
    %v697 = vrot.slane %v15, %v696
    %v698 = vadd.f32 %v693, %v697
    %v699 = vmax.f32 %v698, 0.0
    %v700 = vlaneseq
    %v701 = vshrl.u32 %v700, 7
    %v702 = vsub.s32 0, %v701
    %v703 = vrot.slane %v16, %v702
    %v705 = vsel %vm453, %v699, 0
    %v708 = vsel %vm457, %v23, 0
    %710 = vmatprep.subr.mxu0 0.0
    %711 = vmatpush1.msra.mxu0 %v22
    %712 = vmatprep.subr.mxu0 0.0
    %713 = vmatpush1.msra.mxu0 %v708
    %714 = vmatprep.subr.mxu0 0.0
    %715 = vmatpush1.msra.mxu0 0.0
    %716 = vmatprep.subr.mxu0 0.0
    %717 = vmatpush1.msra.mxu0 0.0
    %718 = vmatprep.subr.mxu0 0.0
    %719 = vmatpush1.msra.mxu0 0.0
    %720 = vmatprep.subr.mxu0 0.0
    %721 = vmatpush1.msra.mxu0 0.0
    %722 = vmatprep.subr.mxu0 0.0
    %723 = vmatpush1.msra.mxu0 0.0
    %724 = vmatprep.subr.mxu0 0.0
    %725 = vmatpush1.msra.mxu0 0.0
    %726 = vmatprep.subr.mxu0 0.0
    %727 = vmatpush1.msra.mxu0 0.0
    %728 = vmatprep.subr.mxu0 0.0
    %729 = vmatpush1.msra.mxu0 0.0
    %730 = vmatprep.subr.mxu0 0.0
    %731 = vmatpush1.msra.mxu0 0.0
    %732 = vmatprep.subr.mxu0 0.0
    %733 = vmatpush1.msra.mxu0 0.0
    %734 = vmatprep.subr.mxu0 0.0
    %735 = vmatpush1.msra.mxu0 0.0
    %736 = vmatprep.subr.mxu0 0.0
    %737 = vmatpush1.msra.mxu0 0.0
    %738 = vmatprep.subr.mxu0 0.0
    %739 = vmatpush1.msra.mxu0 0.0
    %740 = vmatprep.subr.mxu0 0.0
    %741 = vmatpush1.msra.mxu0 0.0
    %742 = vmatprep.subr.mxu0 0.0
    %743 = vmatpush1.msra.mxu0 0.0
    %744 = vmatprep.subr.mxu0 0.0
    %745 = vmatpush1.msra.mxu0 0.0
    %746 = vmatprep.subr.mxu0 0.0
    %747 = vmatpush1.msra.mxu0 0.0
    %748 = vmatprep.subr.mxu0 0.0
    %749 = vmatpush1.msra.mxu0 0.0
    %750 = vmatprep.subr.mxu0 0.0
    %751 = vmatpush1.msra.mxu0 0.0
    %752 = vmatprep.subr.mxu0 0.0
    %753 = vmatpush1.msra.mxu0 0.0
    %754 = vmatprep.subr.mxu0 0.0
    %755 = vmatpush1.msra.mxu0 0.0
    %756 = vmatprep.subr.mxu0 0.0
    %757 = vmatpush1.msra.mxu0 0.0
    %758 = vmatprep.subr.mxu0 0.0
    %759 = vmatpush1.msra.mxu0 0.0
    %760 = vmatprep.subr.mxu0 0.0
    %761 = vmatpush1.msra.mxu0 0.0
    %762 = vmatprep.subr.mxu0 0.0
    %763 = vmatpush1.msra.mxu0 0.0
    %764 = vmatprep.subr.mxu0 0.0
    %765 = vmatpush1.msra.mxu0 0.0
    %766 = vmatprep.subr.mxu0 0.0
    %767 = vmatpush1.msra.mxu0 0.0
    %768 = vmatprep.subr.mxu0 0.0
    %769 = vmatpush1.msra.mxu0 0.0
    %770 = vmatprep.subr.mxu0 0.0
    %771 = vmatpush1.msra.mxu0 0.0
    %772 = vmatprep.subr.mxu0 0.0
    %773 = vmatpush1.msra.mxu0 0.0
    %774 = vmatprep.mubr.f32.mxu0 0.0
    %775 = vmatmul.mubr.f32.gmra.mrb[0].mxu0 %v705
    %v776 = vpop.f32.mrb[0].mxu0
    %v777 = vadd.f32 %v703, %v776
    %v778 = vpop.f32.mrb[0].mxu0
    %779 = vdwg.mxu0
    %v780 = vsel %vm453, %v777, -inf
    %781 = vmax.xlane.f32.xlu0 %v780
    %v782 = vpop.xlane.xlu0 %781
    %v783 = vsub.f32 %v777, %v782
    %v784 = vmul.f32 %v783, 1.442695
    %v785 = vpow.pop %v784
    %v786 = vsel %vm453, %v785, 0.0
    %787 = vadd.xlane.f32.xlu0 %v786
    %v788 = vpop.xlane.xlu0 %787
    %v789 = vlog2.pop %v788
    %v790 = vmul.f32 %v789, 0.6931472
    %v791 = vsub.f32 %v783, %v790
    %792 = vst.msk [vmem:[#allocation2] sm:$0xff] %vm453, %v791
    // Predicated region
    $region14: #{tpu_custom_call.1} parent=1 // pred_check
      _
    $region15: #{tpu_custom_call.1} parent=1 // pred_check_branch
      %794 = sbr.rel (0) target = $region17
    $region16: #{tpu_custom_call.1} parent=1 // pred_region
      %s796 = ssub.s32 128, 128
      %797 = vsyncadd [#allocation3], %s796
      %s799 = sshll.u32 [#allocation2], 4
      %s800 = int_to_ptr.vmem [resolvable:$true] %s799
      %802 = dma.vmem_to_hbm [thread:$0]  %s800, 128, %s3, [#allocation3]
    $region17: #{tpu_custom_call.1} parent=1 // pred_fallthru
      _
    // Predicated region
    $region18: #{tpu_custom_call.1} parent=1 // pred_check
      _
    $region19: #{tpu_custom_call.1} parent=1 // pred_check_branch
      %804 = sbr.rel (0) target = $region21
    $region20: #{tpu_custom_call.1} parent=1 // pred_region
      %805 = dma.done [#allocation3], 128
    $region21: #{tpu_custom_call.1} parent=1 // pred_fallthru
      _
    %806 = vsyncpa [#allocation3], 1

</llo_original>
